<compile_context>
chip_gen: v7x
topology: tpu7x:2x2x1
jax: 0.10.0
libtpu: 0.0.40
codegen_flags: <defaults>
</compile_context>

<pallas_src>
import functools

import jax
import jax.numpy as jnp
from jax import lax
from jax.experimental import pallas as pl
from jax.experimental.pallas import tpu as pltpu


F_IN, H1, H2, F_OUT = 9, 64, 32, 1

DEFAULT_TB = 16384   # batch rows (lanes) per grid step
CHUNK = 1024         # lanes per in-kernel compute chunk (bounds intermediates)


def _round_up(n, m):
    return ((n + m - 1) // m) * m


def _cdiv(n, m):
    return (n + m - 1) // m


def _mlp_kernel(xt_ref, w1_ref, b1_ref, w2_ref, b2_ref, w3_ref, b3_ref, o_ref,
                *, chunk):
    """xt_ref: [9, TB] (feature-major), o_ref: [1, TB]."""
    w1 = w1_ref[...]        # [64, 9]
    b1 = b1_ref[...]        # [64, 1]
    w2 = w2_ref[...]        # [32, 64]  (f32, or bf16 if use_bf16)
    b2 = b2_ref[...]        # [32, 1]
    w3c = w3_ref[...]       # [32, 1]   layer-3 weight, already a column
    b3 = b3_ref[...]        # [1, 1]

    def compute(start, width):
        # start: lane offset (multiple of 128, may be dynamic); width: static.
        xt = xt_ref[:, pl.ds(start, width)]                       # [9, width]

        # ---- layer 1 on the VPU: 9 broadcast FMAs ([64,1] x [1,width]).
        # K=9 would be >90% zero-padding on the MXU contraction.
        acc = w1[:, 0:1] * xt[0:1, :]
        for k in range(1, F_IN):
            acc = acc + w1[:, k:k + 1] * xt[k:k + 1, :]
        h1 = jnp.maximum(acc + b1, 0.0)                           # [64, width]

        # ---- layer 2: the only matmul worth an MXU pass.
        h2 = jnp.dot(w2, h1.astype(w2.dtype),
                     preferred_element_type=jnp.float32) + b2
        h2 = jnp.maximum(h2, 0.0)                                 # [32, width]

        # ---- layer 3 on VPU + XLU sublane reduce: a [1,32]@[32,N] MXU pass
        # would be almost entirely padding.
        o = jnp.sum(h2 * w3c, axis=0, keepdims=True) + b3         # [1, width]
        o_ref[:, pl.ds(start, width)] = o.astype(o_ref.dtype)

    tb = xt_ref.shape[1]
    n_full = tb // chunk
    rem = tb - n_full * chunk                     # static, multiple of 128

    if n_full <= 8:
        # Short/static case (covers small batches): fully unrolled, static
        # lane offsets, best LLO scheduling.
        for j in range(n_full):
            compute(j * chunk, chunk)
    else:
        def body(j, carry):
            compute(pl.multiple_of(j * chunk, 128), chunk)
            return carry
        lax.fori_loop(0, n_full, body, 0)
    if rem:
        compute(n_full * chunk, rem)              # static tail chunk


@functools.partial(jax.jit, static_argnames=("tb", "chunk", "use_bf16"))
def energy_model_forward(x, params, *, tb=DEFAULT_TB, chunk=CHUNK,
                         use_bf16=False):
    """x: [B, 9] float32. Returns [B, 1] float32 (matches nn.Linear output)."""
    B = x.shape[0]
    w1, b1 = params["w1"], params["b1"]
    w2, b2 = params["w2"], params["b2"]
    w3, b3 = params["w3"], params["b3"]
    if use_bf16:
        # bf16-native MXU pass for layer 2 (f32 matmul is multi-pass).
        # NOTE: breaks the 1e-5 allclose check, so off by default.
        w2 = w2.astype(jnp.bfloat16)
    w3c = w3.reshape(H2, F_OUT)  # [32, 1]: column layout for in-kernel VPU use

    # ---- tile selection -----------------------------------------------------
    b128 = _round_up(B, 128)                        # lane-pad only, not tile-pad
    tb = max(128, min(_round_up(tb, 128), b128))    # force multiple of 128
    n_steps = _cdiv(b128, tb)
    if n_steps > 1 and n_steps % 2:
        n_steps += 1       # even #steps so v7x's 2 TensorCores split the batch
    tb = _round_up(_cdiv(b128, n_steps), 128)       # equal, lane-aligned tiles
    chunk = max(128, min(_round_up(chunk, 128), tb))
    b_pad = n_steps * tb
    assert tb % 128 == 0 and b_pad % tb == 0 and b_pad >= B

    # Single fused pad+transpose; padded columns are zeros. allow_input_fusion
    # lets XLA fuse this producer into the pallas-call input read instead of
    # materializing a second copy of x in HBM.
    xt = jnp.pad(x, ((0, b_pad - B), (0, 0))).T      # [9, b_pad]

    const = lambda shape: pl.BlockSpec(shape, lambda i: (0, 0))
    weight_bytes = 4 * (H1 * F_IN + H1 + H2 * H1 + H2 + F_OUT * H2 + F_OUT)
    cost = pl.CostEstimate(
        flops=2 * b_pad * (F_IN * H1 + H1 * H2 + H2 * F_OUT),
        transcendentals=0,
        bytes_accessed=4 * b_pad * (F_IN + F_OUT) + weight_bytes,
    )

    out = pl.pallas_call(
        functools.partial(_mlp_kernel, chunk=chunk),
        out_shape=jax.ShapeDtypeStruct((F_OUT, b_pad), jnp.float32),
        grid=(n_steps,),
        in_specs=[
            pl.BlockSpec((F_IN, tb), lambda i: (0, i)),   # streamed x tile
            const((H1, F_IN)), const((H1, 1)),            # W1, b1 (VMEM-resident)
            const((H2, H1)), const((H2, 1)),              # W2, b2
            const((H2, F_OUT)), const((F_OUT, 1)),        # W3 (as column), b3
        ],
        out_specs=pl.BlockSpec((F_OUT, tb), lambda i: (0, i)),   # lane-dense out
        compiler_params=pltpu.CompilerParams(
            # Batch axis is fully independent; on v7x this lets both TCs share
            # the grid.  TODO(synk): if xprof shows one v7x TC idle, switch to
            # pltpu.CORE_PARALLEL / explicit core_map split of the batch axis.
            dimension_semantics=("parallel",),
            allow_input_fusion=[0],
        ),
        cost_estimate=cost,
    )(xt, w1, b1, w2, b2, w3c, b3)

    return out[:, :B].T   # [B, 1]


def init_params(key):
    """nn.Linear-style init: U(-1/sqrt(fan_in), 1/sqrt(fan_in)).
    Weights stored [out_features, in_features] (PyTorch convention),
    biases stored [out_features, 1] for lane-axis broadcasting."""
    def linear(key, fan_in, fan_out):
        kw, kb = jax.random.split(key)
        bound = 1.0 / jnp.sqrt(jnp.float32(fan_in))
        w = jax.random.uniform(kw, (fan_out, fan_in), jnp.float32, -bound, bound)
        b = jax.random.uniform(kb, (fan_out, 1), jnp.float32, -bound, bound)
        return w, b

    k1, k2, k3 = jax.random.split(key, 3)
    w1, b1 = linear(k1, F_IN, H1)
    w2, b2 = linear(k2, H1, H2)
    w3, b3 = linear(k3, H2, F_OUT)
    return {"w1": w1, "b1": b1, "w2": w2, "b2": b2, "w3": w3, "b3": b3}


def _reference(x, p):
    h1 = jnp.maximum(x @ p["w1"].T + p["b1"].T, 0.0)
    h2 = jnp.maximum(h1 @ p["w2"].T + p["b2"].T, 0.0)
    return h2 @ p["w3"].T + p["b3"].T


if __name__ == "__main__":
    key = jax.random.PRNGKey(0)
    k_params, k_x = jax.random.split(key)

    params = init_params(k_params)
    B = 8
    x = jax.random.normal(k_x, (B, F_IN), dtype=jnp.float32)

    out = jax.block_until_ready(energy_model_forward(x, params))
    ref = _reference(x, params)

    assert out.shape == (B, 1), out.shape
    assert jnp.allclose(out, ref, atol=1e-5, rtol=1e-5), "mismatch vs reference"

    print("KERNEL_OK")
</pallas_src>

<mosaic_0001>
module attributes {stable_mosaic.version = 11 : i64} {
  func.func @_mlp_kernel(%arg0: i32, %arg1: memref<9x128xf32, #tpu.memory_space<vmem>>, %arg2: memref<64x9xf32, #tpu.memory_space<vmem>>, %arg3: memref<64x1xf32, #tpu.memory_space<vmem>>, %arg4: memref<32x64xf32, #tpu.memory_space<vmem>>, %arg5: memref<32x1xf32, #tpu.memory_space<vmem>>, %arg6: memref<32x1xf32, #tpu.memory_space<vmem>>, %arg7: memref<1x1xf32, #tpu.memory_space<vmem>>, %arg8: memref<1x128xf32, #tpu.memory_space<vmem>>) attributes {dimension_semantics = [#tpu.dimension_semantics<parallel>], iteration_bounds = array<i64: 1>, scalar_prefetch = 0 : i64, scratch_operands = 0 : i64, tpu.core_type = #tpu.core_type<tc>, window_params = [{transform_indices = @transform_0, window_bounds = array<i64: 9, 128>}, {pipeline_mode = #tpu.pipeline_mode<synchronous>, transform_indices = @transform_1, window_bounds = array<i64: 64, 9>}, {pipeline_mode = #tpu.pipeline_mode<synchronous>, transform_indices = @transform_2, window_bounds = array<i64: 64, 1>}, {pipeline_mode = #tpu.pipeline_mode<synchronous>, transform_indices = @transform_3, window_bounds = array<i64: 32, 64>}, {pipeline_mode = #tpu.pipeline_mode<synchronous>, transform_indices = @transform_4, window_bounds = array<i64: 32, 1>}, {pipeline_mode = #tpu.pipeline_mode<synchronous>, transform_indices = @transform_5, window_bounds = array<i64: 32, 1>}, {pipeline_mode = #tpu.pipeline_mode<synchronous>, transform_indices = @transform_6, window_bounds = array<i64: 1, 1>}, {transform_indices = @transform_7, window_bounds = array<i64: 1, 128>}]} {
    %c0 = arith.constant 0 : index
    %c0_0 = arith.constant 0 : index
    %0 = vector.load %arg2[%c0, %c0_0] : memref<64x9xf32, #tpu.memory_space<vmem>>, vector<64x9xf32>
    %c0_1 = arith.constant 0 : index
    %c0_2 = arith.constant 0 : index
    %1 = vector.load %arg3[%c0_1, %c0_2] : memref<64x1xf32, #tpu.memory_space<vmem>>, vector<64x1xf32>
    %c0_3 = arith.constant 0 : index
    %c0_4 = arith.constant 0 : index
    %2 = vector.load %arg4[%c0_3, %c0_4] : memref<32x64xf32, #tpu.memory_space<vmem>>, vector<32x64xf32>
    %c0_5 = arith.constant 0 : index
    %c0_6 = arith.constant 0 : index
    %3 = vector.load %arg5[%c0_5, %c0_6] : memref<32x1xf32, #tpu.memory_space<vmem>>, vector<32x1xf32>
    %c0_7 = arith.constant 0 : index
    %c0_8 = arith.constant 0 : index
    %4 = vector.load %arg6[%c0_7, %c0_8] : memref<32x1xf32, #tpu.memory_space<vmem>>, vector<32x1xf32>
    %c0_9 = arith.constant 0 : index
    %c0_10 = arith.constant 0 : index
    %5 = vector.load %arg7[%c0_9, %c0_10] : memref<1x1xf32, #tpu.memory_space<vmem>>, vector<1x1xf32>
    %c0_11 = arith.constant 0 : index
    %c0_12 = arith.constant 0 : index
    %6 = vector.load %arg1[%c0_11, %c0_12] : memref<9x128xf32, #tpu.memory_space<vmem>>, vector<9x128xf32>
    %7 = vector.extract_strided_slice %0 {offsets = [0, 0], sizes = [64, 1], strides = [1, 1]} : vector<64x9xf32> to vector<64x1xf32>
    %8 = vector.extract_strided_slice %6 {offsets = [0, 0], sizes = [1, 128], strides = [1, 1]} : vector<9x128xf32> to vector<1x128xf32>
    %9 = vector.broadcast %7 : vector<64x1xf32> to vector<64x128xf32>
    %10 = vector.broadcast %8 : vector<1x128xf32> to vector<64x128xf32>
    %11 = arith.mulf %9, %10 : vector<64x128xf32>
    %12 = vector.extract_strided_slice %0 {offsets = [0, 1], sizes = [64, 1], strides = [1, 1]} : vector<64x9xf32> to vector<64x1xf32>
    %13 = vector.extract_strided_slice %6 {offsets = [1, 0], sizes = [1, 128], strides = [1, 1]} : vector<9x128xf32> to vector<1x128xf32>
    %14 = vector.broadcast %12 : vector<64x1xf32> to vector<64x128xf32>
    %15 = vector.broadcast %13 : vector<1x128xf32> to vector<64x128xf32>
    %16 = arith.mulf %14, %15 : vector<64x128xf32>
    %17 = arith.addf %11, %16 : vector<64x128xf32>
    %18 = vector.extract_strided_slice %0 {offsets = [0, 2], sizes = [64, 1], strides = [1, 1]} : vector<64x9xf32> to vector<64x1xf32>
    %19 = vector.extract_strided_slice %6 {offsets = [2, 0], sizes = [1, 128], strides = [1, 1]} : vector<9x128xf32> to vector<1x128xf32>
    %20 = vector.broadcast %18 : vector<64x1xf32> to vector<64x128xf32>
    %21 = vector.broadcast %19 : vector<1x128xf32> to vector<64x128xf32>
    %22 = arith.mulf %20, %21 : vector<64x128xf32>
    %23 = arith.addf %17, %22 : vector<64x128xf32>
    %24 = vector.extract_strided_slice %0 {offsets = [0, 3], sizes = [64, 1], strides = [1, 1]} : vector<64x9xf32> to vector<64x1xf32>
    %25 = vector.extract_strided_slice %6 {offsets = [3, 0], sizes = [1, 128], strides = [1, 1]} : vector<9x128xf32> to vector<1x128xf32>
    %26 = vector.broadcast %24 : vector<64x1xf32> to vector<64x128xf32>
    %27 = vector.broadcast %25 : vector<1x128xf32> to vector<64x128xf32>
    %28 = arith.mulf %26, %27 : vector<64x128xf32>
    %29 = arith.addf %23, %28 : vector<64x128xf32>
    %30 = vector.extract_strided_slice %0 {offsets = [0, 4], sizes = [64, 1], strides = [1, 1]} : vector<64x9xf32> to vector<64x1xf32>
    %31 = vector.extract_strided_slice %6 {offsets = [4, 0], sizes = [1, 128], strides = [1, 1]} : vector<9x128xf32> to vector<1x128xf32>
    %32 = vector.broadcast %30 : vector<64x1xf32> to vector<64x128xf32>
    %33 = vector.broadcast %31 : vector<1x128xf32> to vector<64x128xf32>
    %34 = arith.mulf %32, %33 : vector<64x128xf32>
    %35 = arith.addf %29, %34 : vector<64x128xf32>
    %36 = vector.extract_strided_slice %0 {offsets = [0, 5], sizes = [64, 1], strides = [1, 1]} : vector<64x9xf32> to vector<64x1xf32>
    %37 = vector.extract_strided_slice %6 {offsets = [5, 0], sizes = [1, 128], strides = [1, 1]} : vector<9x128xf32> to vector<1x128xf32>
    %38 = vector.broadcast %36 : vector<64x1xf32> to vector<64x128xf32>
    %39 = vector.broadcast %37 : vector<1x128xf32> to vector<64x128xf32>
    %40 = arith.mulf %38, %39 : vector<64x128xf32>
    %41 = arith.addf %35, %40 : vector<64x128xf32>
    %42 = vector.extract_strided_slice %0 {offsets = [0, 6], sizes = [64, 1], strides = [1, 1]} : vector<64x9xf32> to vector<64x1xf32>
    %43 = vector.extract_strided_slice %6 {offsets = [6, 0], sizes = [1, 128], strides = [1, 1]} : vector<9x128xf32> to vector<1x128xf32>
    %44 = vector.broadcast %42 : vector<64x1xf32> to vector<64x128xf32>
    %45 = vector.broadcast %43 : vector<1x128xf32> to vector<64x128xf32>
    %46 = arith.mulf %44, %45 : vector<64x128xf32>
    %47 = arith.addf %41, %46 : vector<64x128xf32>
    %48 = vector.extract_strided_slice %0 {offsets = [0, 7], sizes = [64, 1], strides = [1, 1]} : vector<64x9xf32> to vector<64x1xf32>
    %49 = vector.extract_strided_slice %6 {offsets = [7, 0], sizes = [1, 128], strides = [1, 1]} : vector<9x128xf32> to vector<1x128xf32>
    %50 = vector.broadcast %48 : vector<64x1xf32> to vector<64x128xf32>
    %51 = vector.broadcast %49 : vector<1x128xf32> to vector<64x128xf32>
    %52 = arith.mulf %50, %51 : vector<64x128xf32>
    %53 = arith.addf %47, %52 : vector<64x128xf32>
    %54 = vector.extract_strided_slice %0 {offsets = [0, 8], sizes = [64, 1], strides = [1, 1]} : vector<64x9xf32> to vector<64x1xf32>
    %55 = vector.extract_strided_slice %6 {offsets = [8, 0], sizes = [1, 128], strides = [1, 1]} : vector<9x128xf32> to vector<1x128xf32>
    %56 = vector.broadcast %54 : vector<64x1xf32> to vector<64x128xf32>
    %57 = vector.broadcast %55 : vector<1x128xf32> to vector<64x128xf32>
    %58 = arith.mulf %56, %57 : vector<64x128xf32>
    %59 = arith.addf %53, %58 : vector<64x128xf32>
    %60 = vector.broadcast %1 : vector<64x1xf32> to vector<64x128xf32>
    %61 = arith.addf %59, %60 : vector<64x128xf32>
    %cst = arith.constant 0.000000e+00 : f32
    %62 = vector.broadcast %cst : f32 to vector<64x128xf32>
    %63 = arith.maximumf %61, %62 : vector<64x128xf32>
    %cst_13 = arith.constant dense<0.000000e+00> : vector<32x128xf32>
    %64 = tpu.matmul %2, %63, %cst_13 {dimension_numbers = #tpu.dot_dimension_numbers<[1], [0], [0], [1], [0, 0, 1, 1], [], []>} : vector<32x64xf32>, vector<64x128xf32>, vector<32x128xf32> -> vector<32x128xf32>
    %65 = vector.broadcast %3 : vector<32x1xf32> to vector<32x128xf32>
    %66 = arith.addf %64, %65 : vector<32x128xf32>
    %cst_14 = arith.constant 0.000000e+00 : f32
    %67 = vector.broadcast %cst_14 : f32 to vector<32x128xf32>
    %68 = arith.maximumf %66, %67 : vector<32x128xf32>
    %69 = vector.broadcast %4 : vector<32x1xf32> to vector<32x128xf32>
    %70 = arith.mulf %68, %69 : vector<32x128xf32>
    %cst_15 = arith.constant dense<0.000000e+00> : vector<128xf32>
    %71 = vector.multi_reduction <add>, %70, %cst_15 [0] : vector<32x128xf32> to vector<128xf32>
    %72 = vector.shape_cast %71 : vector<128xf32> to vector<1x128xf32>
    %73 = vector.broadcast %5 : vector<1x1xf32> to vector<1x128xf32>
    %74 = arith.addf %72, %73 : vector<1x128xf32>
    %c0_16 = arith.constant 0 : index
    %c0_17 = arith.constant 0 : index
    %75 = vector.load %arg8[%c0_16, %c0_17] : memref<1x128xf32, #tpu.memory_space<vmem>>, vector<1x128xf32>
    tpu.vector_store %arg8[%c0_16, %c0_17], %74 {strides = array<i32>} : memref<1x128xf32, #tpu.memory_space<vmem>>, vector<1x128xf32>,
    return
  }
  func.func @transform_0(%arg0: i32) -> (i32, i32) {
    %c0_i32 = arith.constant 0 : i32
    %c0_i32_0 = arith.constant 0 : i32
    return %c0_i32, %arg0 : i32, i32
  }
  func.func @transform_1(%arg0: i32) -> (i32, i32) {
    %c0_i32 = arith.constant 0 : i32
    %c0_i32_0 = arith.constant 0 : i32
    %c0_i32_1 = arith.constant 0 : i32
    return %c0_i32, %c0_i32_0 : i32, i32
  }
  func.func @transform_2(%arg0: i32) -> (i32, i32) {
    %c0_i32 = arith.constant 0 : i32
    %c0_i32_0 = arith.constant 0 : i32
    %c0_i32_1 = arith.constant 0 : i32
    return %c0_i32, %c0_i32_0 : i32, i32
  }
  func.func @transform_3(%arg0: i32) -> (i32, i32) {
    %c0_i32 = arith.constant 0 : i32
    %c0_i32_0 = arith.constant 0 : i32
    %c0_i32_1 = arith.constant 0 : i32
    return %c0_i32, %c0_i32_0 : i32, i32
  }
  func.func @transform_4(%arg0: i32) -> (i32, i32) {
    %c0_i32 = arith.constant 0 : i32
    %c0_i32_0 = arith.constant 0 : i32
    %c0_i32_1 = arith.constant 0 : i32
    return %c0_i32, %c0_i32_0 : i32, i32
  }
  func.func @transform_5(%arg0: i32) -> (i32, i32) {
    %c0_i32 = arith.constant 0 : i32
    %c0_i32_0 = arith.constant 0 : i32
    %c0_i32_1 = arith.constant 0 : i32
    return %c0_i32, %c0_i32_0 : i32, i32
  }
  func.func @transform_6(%arg0: i32) -> (i32, i32) {
    %c0_i32 = arith.constant 0 : i32
    %c0_i32_0 = arith.constant 0 : i32
    %c0_i32_1 = arith.constant 0 : i32
    return %c0_i32, %c0_i32_0 : i32, i32
  }
  func.func @transform_7(%arg0: i32) -> (i32, i32) {
    %c0_i32 = arith.constant 0 : i32
    %c0_i32_0 = arith.constant 0 : i32
    return %c0_i32, %arg0 : i32, i32
  }
}

</mosaic_0001>

<llo_original>
// kernel: energy_model_forward.1
$region0: #{energy_model_forward.1}
  #allocation0 [shape = 'u32[]', space=smem, size = 0x4, offset = 0x4, fixed_abs, tag = 'smem constant byte address 0x4 - core index']
  #allocation1 [shape = 'u32[144,128]{1,0:T(1,128)}', space=vmem, size = 0x12000, scoped, tag = 'internal scratch']
  #allocation2 [shape = 'f32[1,1]{1,0:T(1,128)S(1)}', space=vmem, size = 0x200, scoped, tag = 'scoped memory for energy_model_forward.1']
  %s0 = inlined_call_operand.vmem [shape: f32[9,128], index: 0, kind: input, shape index: {}]
  %s1 = inlined_call_operand.vmem [shape: f32[64,9], index: 1, kind: input, shape index: {}]
  %s2 = inlined_call_operand.vmem [shape: f32[64,1], index: 2, kind: input, shape index: {}]
  %s3 = inlined_call_operand.vmem [shape: f32[32,64], index: 3, kind: input, shape index: {}]
  %s4 = inlined_call_operand.vmem [shape: f32[32,1], index: 4, kind: input, shape index: {}]
  %s5 = inlined_call_operand.vmem [shape: f32[32,1], index: 5, kind: input, shape index: {}]
  %s6 = inlined_call_operand.<no memory space> [shape: f32[1,1], index: 6, kind: input, shape index: {}]
  %s7 = inlined_call_operand.vmem [shape: f32[1,128], index: 7, kind: output, shape index: {}]
  %s8 = sld [smem:[#allocation0]]
  $region38: #{energy_model_forward.1} parent=0
    _
  %s10 = ssub.s32 1, %s8
  %s11 = scalar_select 0, %s10, %s8
  %v12 = vstv %s6
  %13 = vst [vmem:[#allocation2] sm:$0x1] %v12
  // Predicated region
  $region2: #{energy_model_forward.1} parent=0 // pred_check
    _
  $region3: #{energy_model_forward.1} parent=0 // pred_check_branch
    %15 = sbr.rel (0) target = $region5
  $region4: #{energy_model_forward.1} parent=0 // pred_region
    _
  $region5: #{energy_model_forward.1} parent=0 // pred_fallthru
    _
  // Predicated region
  $region6: #{energy_model_forward.1} parent=0 // pred_check
    _
  $region7: #{energy_model_forward.1} parent=0 // pred_check_branch
    %17 = sbr.rel (0) target = $region9
  $region8: #{energy_model_forward.1} parent=0 // pred_region
    _
  $region9: #{energy_model_forward.1} parent=0 // pred_fallthru
    _
  // Predicated region
  $region10: #{energy_model_forward.1} parent=0 // pred_check
    _
  $region11: #{energy_model_forward.1} parent=0 // pred_check_branch
    %19 = sbr.rel (0) target = $region13
  $region12: #{energy_model_forward.1} parent=0 // pred_region
    _
  $region13: #{energy_model_forward.1} parent=0 // pred_fallthru
    _
  // Predicated region
  $region14: #{energy_model_forward.1} parent=0 // pred_check
    _
  $region15: #{energy_model_forward.1} parent=0 // pred_check_branch
    %21 = sbr.rel (0) target = $region17
  $region16: #{energy_model_forward.1} parent=0 // pred_region
    _
  $region17: #{energy_model_forward.1} parent=0 // pred_fallthru
    _
  // Predicated region
  $region18: #{energy_model_forward.1} parent=0 // pred_check
    _
  $region19: #{energy_model_forward.1} parent=0 // pred_check_branch
    %23 = sbr.rel (0) target = $region21
  $region20: #{energy_model_forward.1} parent=0 // pred_region
    _
  $region21: #{energy_model_forward.1} parent=0 // pred_fallthru
    _
  // Predicated region
  $region22: #{energy_model_forward.1} parent=0 // pred_check
    _
  $region23: #{energy_model_forward.1} parent=0 // pred_check_branch
    %25 = sbr.rel (0) target = $region25
  $region24: #{energy_model_forward.1} parent=0 // pred_region
    _
  $region25: #{energy_model_forward.1} parent=0 // pred_fallthru
    _
  // Predicated region
  $region26: #{energy_model_forward.1} parent=0 // pred_check
    _
  $region27: #{energy_model_forward.1} parent=0 // pred_check_branch
    %27 = sbr.rel (0) target = $region29
  $region28: #{energy_model_forward.1} parent=0 // pred_region
    _
  $region29: #{energy_model_forward.1} parent=0 // pred_fallthru
    _
  %v28 = vld [vmem:[%s1] sm:$0xff]
  %v29 = vld [vmem:[%s1 + $0x8] sm:$0xff]
  %v30 = vld [vmem:[%s1 + $0x10] sm:$0xff]
  %v31 = vld [vmem:[%s1 + $0x18] sm:$0xff]
  %v32 = vld [vmem:[%s1 + $0x20] sm:$0xff]
  %v33 = vld [vmem:[%s1 + $0x28] sm:$0xff]
  %v34 = vld [vmem:[%s1 + $0x30] sm:$0xff]
  %v35 = vld [vmem:[%s1 + $0x38] sm:$0xff]
  %v36 = vld [vmem:[%s2] sm:$0xff]
  %v37 = vld [vmem:[%s2 + $0x8] sm:$0xff]
  %v38 = vld [vmem:[%s2 + $0x10] sm:$0xff]
  %v39 = vld [vmem:[%s2 + $0x18] sm:$0xff]
  %v40 = vld [vmem:[%s2 + $0x20] sm:$0xff]
  %v41 = vld [vmem:[%s2 + $0x28] sm:$0xff]
  %v42 = vld [vmem:[%s2 + $0x30] sm:$0xff]
  %v43 = vld [vmem:[%s2 + $0x38] sm:$0xff]
  %v44 = vld [vmem:[%s3] sm:$0xff]
  %v45 = vld [vmem:[%s3 + $0x8] sm:$0xff]
  %v46 = vld [vmem:[%s3 + $0x10] sm:$0xff]
  %v47 = vld [vmem:[%s3 + $0x18] sm:$0xff]
  %v48 = vld [vmem:[%s4] sm:$0xff]
  %v49 = vld [vmem:[%s4 + $0x8] sm:$0xff]
  %v50 = vld [vmem:[%s4 + $0x10] sm:$0xff]
  %v51 = vld [vmem:[%s4 + $0x18] sm:$0xff]
  %v52 = vld [vmem:[%s5] sm:$0xff]
  %v53 = vld [vmem:[%s5 + $0x8] sm:$0xff]
  %v54 = vld [vmem:[%s5 + $0x10] sm:$0xff]
  %v55 = vld [vmem:[%s5 + $0x18] sm:$0xff]
  %v56 = vld [vmem:[#allocation2] sm:$0x1]
  %v57 = vld [vmem:[%s0] sm:$0xff]
  %v58 = vld [vmem:[%s0 + $0x8] sm:$0x1]
  %60 = vset.pattern.permute.xlu0 0
  %61 = vperm.xlu0 %60, %v28
  %v62 = vpop.permute.xlu0 %61
  %65 = vset.pattern.permute.xlu0 0
  %66 = vperm.xlu0 %65, %v29
  %v67 = vpop.permute.xlu0 %66
  %70 = vset.pattern.permute.xlu0 0
  %71 = vperm.xlu0 %70, %v30
  %v72 = vpop.permute.xlu0 %71
  %75 = vset.pattern.permute.xlu0 0
  %76 = vperm.xlu0 %75, %v31
  %v77 = vpop.permute.xlu0 %76
  %80 = vset.pattern.permute.xlu0 0
  %81 = vperm.xlu0 %80, %v32
  %v82 = vpop.permute.xlu0 %81
  %85 = vset.pattern.permute.xlu0 0
  %86 = vperm.xlu0 %85, %v33
  %v87 = vpop.permute.xlu0 %86
  %90 = vset.pattern.permute.xlu0 0
  %91 = vperm.xlu0 %90, %v34
  %v92 = vpop.permute.xlu0 %91
  %95 = vset.pattern.permute.xlu0 0
  %96 = vperm.xlu0 %95, %v35
  %v97 = vpop.permute.xlu0 %96
  %v99 = vlaneseq
  %v100 = vshrl.u32 %v99, 7
  %v101 = vsub.s32 0, %v100
  %v102 = vrot.slane %v57, %v101
  %v103 = vmul.f32 %v62, %v102
  %v104 = vmul.f32 %v67, %v102
  %v105 = vmul.f32 %v72, %v102
  %v106 = vmul.f32 %v77, %v102
  %v107 = vmul.f32 %v82, %v102
  %v108 = vmul.f32 %v87, %v102
  %v109 = vmul.f32 %v92, %v102
  %v110 = vmul.f32 %v97, %v102
  %111 = vset.pattern.permute.xlu0 1
  %112 = vperm.xlu0 %111, %v28
  %v113 = vpop.permute.xlu0 %112
  %115 = vset.pattern.permute.xlu0 1
  %116 = vperm.xlu0 %115, %v29
  %v117 = vpop.permute.xlu0 %116
  %119 = vset.pattern.permute.xlu0 1
  %120 = vperm.xlu0 %119, %v30
  %v121 = vpop.permute.xlu0 %120
  %123 = vset.pattern.permute.xlu0 1
  %124 = vperm.xlu0 %123, %v31
  %v125 = vpop.permute.xlu0 %124
  %127 = vset.pattern.permute.xlu0 1
  %128 = vperm.xlu0 %127, %v32
  %v129 = vpop.permute.xlu0 %128
  %131 = vset.pattern.permute.xlu0 1
  %132 = vperm.xlu0 %131, %v33
  %v133 = vpop.permute.xlu0 %132
  %135 = vset.pattern.permute.xlu0 1
  %136 = vperm.xlu0 %135, %v34
  %v137 = vpop.permute.xlu0 %136
  %139 = vset.pattern.permute.xlu0 1
  %140 = vperm.xlu0 %139, %v35
  %v141 = vpop.permute.xlu0 %140
  %v143 = vlaneseq
  %v144 = vshrl.u32 %v143, 7
  %v145 = vsub.s32 1, %v144
  %v146 = vrot.slane %v57, %v145
  %v147 = vmul.f32 %v113, %v146
  %v148 = vmul.f32 %v117, %v146
  %v149 = vmul.f32 %v121, %v146
  %v150 = vmul.f32 %v125, %v146
  %v151 = vmul.f32 %v129, %v146
  %v152 = vmul.f32 %v133, %v146
  %v153 = vmul.f32 %v137, %v146
  %v154 = vmul.f32 %v141, %v146
  %v155 = vadd.f32 %v103, %v147
  %v156 = vadd.f32 %v104, %v148
  %v157 = vadd.f32 %v105, %v149
  %v158 = vadd.f32 %v106, %v150
  %v159 = vadd.f32 %v107, %v151
  %v160 = vadd.f32 %v108, %v152
  %v161 = vadd.f32 %v109, %v153
  %v162 = vadd.f32 %v110, %v154
  %163 = vset.pattern.permute.xlu0 2
  %164 = vperm.xlu0 %163, %v28
  %v165 = vpop.permute.xlu0 %164
  %167 = vset.pattern.permute.xlu0 2
  %168 = vperm.xlu0 %167, %v29
  %v169 = vpop.permute.xlu0 %168
  %171 = vset.pattern.permute.xlu0 2
  %172 = vperm.xlu0 %171, %v30
  %v173 = vpop.permute.xlu0 %172
  %175 = vset.pattern.permute.xlu0 2
  %176 = vperm.xlu0 %175, %v31
  %v177 = vpop.permute.xlu0 %176
  %179 = vset.pattern.permute.xlu0 2
  %180 = vperm.xlu0 %179, %v32
  %v181 = vpop.permute.xlu0 %180
  %183 = vset.pattern.permute.xlu0 2
  %184 = vperm.xlu0 %183, %v33
  %v185 = vpop.permute.xlu0 %184
  %187 = vset.pattern.permute.xlu0 2
  %188 = vperm.xlu0 %187, %v34
  %v189 = vpop.permute.xlu0 %188
  %191 = vset.pattern.permute.xlu0 2
  %192 = vperm.xlu0 %191, %v35
  %v193 = vpop.permute.xlu0 %192
  %v195 = vlaneseq
  %v196 = vshrl.u32 %v195, 7
  %v197 = vsub.s32 2, %v196
  %v198 = vrot.slane %v57, %v197
  %v199 = vmul.f32 %v165, %v198
  %v200 = vmul.f32 %v169, %v198
  %v201 = vmul.f32 %v173, %v198
  %v202 = vmul.f32 %v177, %v198
  %v203 = vmul.f32 %v181, %v198
  %v204 = vmul.f32 %v185, %v198
  %v205 = vmul.f32 %v189, %v198
  %v206 = vmul.f32 %v193, %v198
  %v207 = vadd.f32 %v155, %v199
  %v208 = vadd.f32 %v156, %v200
  %v209 = vadd.f32 %v157, %v201
  %v210 = vadd.f32 %v158, %v202
  %v211 = vadd.f32 %v159, %v203
  %v212 = vadd.f32 %v160, %v204
  %v213 = vadd.f32 %v161, %v205
  %v214 = vadd.f32 %v162, %v206
  %215 = vset.pattern.permute.xlu0 3
  %216 = vperm.xlu0 %215, %v28
  %v217 = vpop.permute.xlu0 %216
  %219 = vset.pattern.permute.xlu0 3
  %220 = vperm.xlu0 %219, %v29
  %v221 = vpop.permute.xlu0 %220
  %223 = vset.pattern.permute.xlu0 3
  %224 = vperm.xlu0 %223, %v30
  %v225 = vpop.permute.xlu0 %224
  %227 = vset.pattern.permute.xlu0 3
  %228 = vperm.xlu0 %227, %v31
  %v229 = vpop.permute.xlu0 %228
  %231 = vset.pattern.permute.xlu0 3
  %232 = vperm.xlu0 %231, %v32
  %v233 = vpop.permute.xlu0 %232
  %235 = vset.pattern.permute.xlu0 3
  %236 = vperm.xlu0 %235, %v33
  %v237 = vpop.permute.xlu0 %236
  %239 = vset.pattern.permute.xlu0 3
  %240 = vperm.xlu0 %239, %v34
  %v241 = vpop.permute.xlu0 %240
  %243 = vset.pattern.permute.xlu0 3
  %244 = vperm.xlu0 %243, %v35
  %v245 = vpop.permute.xlu0 %244
  %v247 = vlaneseq
  %v248 = vshrl.u32 %v247, 7
  %v249 = vsub.s32 3, %v248
  %v250 = vrot.slane %v57, %v249
  %v251 = vmul.f32 %v217, %v250
  %v252 = vmul.f32 %v221, %v250
  %v253 = vmul.f32 %v225, %v250
  %v254 = vmul.f32 %v229, %v250
  %v255 = vmul.f32 %v233, %v250
  %v256 = vmul.f32 %v237, %v250
  %v257 = vmul.f32 %v241, %v250
  %v258 = vmul.f32 %v245, %v250
  %v259 = vadd.f32 %v207, %v251
  %v260 = vadd.f32 %v208, %v252
  %v261 = vadd.f32 %v209, %v253
  %v262 = vadd.f32 %v210, %v254
  %v263 = vadd.f32 %v211, %v255
  %v264 = vadd.f32 %v212, %v256
  %v265 = vadd.f32 %v213, %v257
  %v266 = vadd.f32 %v214, %v258
  %267 = vset.pattern.permute.xlu0 4
  %268 = vperm.xlu0 %267, %v28
  %v269 = vpop.permute.xlu0 %268
  %271 = vset.pattern.permute.xlu0 4
  %272 = vperm.xlu0 %271, %v29
  %v273 = vpop.permute.xlu0 %272
  %275 = vset.pattern.permute.xlu0 4
  %276 = vperm.xlu0 %275, %v30
  %v277 = vpop.permute.xlu0 %276
  %279 = vset.pattern.permute.xlu0 4
  %280 = vperm.xlu0 %279, %v31
  %v281 = vpop.permute.xlu0 %280
  %283 = vset.pattern.permute.xlu0 4
  %284 = vperm.xlu0 %283, %v32
  %v285 = vpop.permute.xlu0 %284
  %287 = vset.pattern.permute.xlu0 4
  %288 = vperm.xlu0 %287, %v33
  %v289 = vpop.permute.xlu0 %288
  %291 = vset.pattern.permute.xlu0 4
  %292 = vperm.xlu0 %291, %v34
  %v293 = vpop.permute.xlu0 %292
  %295 = vset.pattern.permute.xlu0 4
  %296 = vperm.xlu0 %295, %v35
  %v297 = vpop.permute.xlu0 %296
  %v299 = vlaneseq
  %v300 = vshrl.u32 %v299, 7
  %v301 = vsub.s32 4, %v300
  %v302 = vrot.slane %v57, %v301
  %v303 = vmul.f32 %v269, %v302
  %v304 = vmul.f32 %v273, %v302
  %v305 = vmul.f32 %v277, %v302
  %v306 = vmul.f32 %v281, %v302
  %v307 = vmul.f32 %v285, %v302
  %v308 = vmul.f32 %v289, %v302
  %v309 = vmul.f32 %v293, %v302
  %v310 = vmul.f32 %v297, %v302
  %v311 = vadd.f32 %v259, %v303
  %v312 = vadd.f32 %v260, %v304
  %v313 = vadd.f32 %v261, %v305
  %v314 = vadd.f32 %v262, %v306
  %v315 = vadd.f32 %v263, %v307
  %v316 = vadd.f32 %v264, %v308
  %v317 = vadd.f32 %v265, %v309
  %v318 = vadd.f32 %v266, %v310
  %319 = vset.pattern.permute.xlu0 5
  %320 = vperm.xlu0 %319, %v28
  %v321 = vpop.permute.xlu0 %320
  %323 = vset.pattern.permute.xlu0 5
  %324 = vperm.xlu0 %323, %v29
  %v325 = vpop.permute.xlu0 %324
  %327 = vset.pattern.permute.xlu0 5
  %328 = vperm.xlu0 %327, %v30
  %v329 = vpop.permute.xlu0 %328
  %331 = vset.pattern.permute.xlu0 5
  %332 = vperm.xlu0 %331, %v31
  %v333 = vpop.permute.xlu0 %332
  %335 = vset.pattern.permute.xlu0 5
  %336 = vperm.xlu0 %335, %v32
  %v337 = vpop.permute.xlu0 %336
  %339 = vset.pattern.permute.xlu0 5
  %340 = vperm.xlu0 %339, %v33
  %v341 = vpop.permute.xlu0 %340
  %343 = vset.pattern.permute.xlu0 5
  %344 = vperm.xlu0 %343, %v34
  %v345 = vpop.permute.xlu0 %344
  %347 = vset.pattern.permute.xlu0 5
  %348 = vperm.xlu0 %347, %v35
  %v349 = vpop.permute.xlu0 %348
  %v351 = vlaneseq
  %v352 = vshrl.u32 %v351, 7
  %v353 = vsub.s32 5, %v352
  %v354 = vrot.slane %v57, %v353
  %v355 = vmul.f32 %v321, %v354
  %v356 = vmul.f32 %v325, %v354
  %v357 = vmul.f32 %v329, %v354
  %v358 = vmul.f32 %v333, %v354
  %v359 = vmul.f32 %v337, %v354
  %v360 = vmul.f32 %v341, %v354
  %v361 = vmul.f32 %v345, %v354
  %v362 = vmul.f32 %v349, %v354
  %v363 = vadd.f32 %v311, %v355
  %v364 = vadd.f32 %v312, %v356
  %v365 = vadd.f32 %v313, %v357
  %v366 = vadd.f32 %v314, %v358
  %v367 = vadd.f32 %v315, %v359
  %v368 = vadd.f32 %v316, %v360
  %v369 = vadd.f32 %v317, %v361
  %v370 = vadd.f32 %v318, %v362
  %371 = vset.pattern.permute.xlu0 6
  %372 = vperm.xlu0 %371, %v28
  %v373 = vpop.permute.xlu0 %372
  %375 = vset.pattern.permute.xlu0 6
  %376 = vperm.xlu0 %375, %v29
  %v377 = vpop.permute.xlu0 %376
  %379 = vset.pattern.permute.xlu0 6
  %380 = vperm.xlu0 %379, %v30
  %v381 = vpop.permute.xlu0 %380
  %383 = vset.pattern.permute.xlu0 6
  %384 = vperm.xlu0 %383, %v31
  %v385 = vpop.permute.xlu0 %384
  %387 = vset.pattern.permute.xlu0 6
  %388 = vperm.xlu0 %387, %v32
  %v389 = vpop.permute.xlu0 %388
  %391 = vset.pattern.permute.xlu0 6
  %392 = vperm.xlu0 %391, %v33
  %v393 = vpop.permute.xlu0 %392
  %395 = vset.pattern.permute.xlu0 6
  %396 = vperm.xlu0 %395, %v34
  %v397 = vpop.permute.xlu0 %396
  %399 = vset.pattern.permute.xlu0 6
  %400 = vperm.xlu0 %399, %v35
  %v401 = vpop.permute.xlu0 %400
  %v403 = vlaneseq
  %v404 = vshrl.u32 %v403, 7
  %v405 = vsub.s32 6, %v404
  %v406 = vrot.slane %v57, %v405
  %v407 = vmul.f32 %v373, %v406
  %v408 = vmul.f32 %v377, %v406
  %v409 = vmul.f32 %v381, %v406
  %v410 = vmul.f32 %v385, %v406
  %v411 = vmul.f32 %v389, %v406
  %v412 = vmul.f32 %v393, %v406
  %v413 = vmul.f32 %v397, %v406
  %v414 = vmul.f32 %v401, %v406
  %v415 = vadd.f32 %v363, %v407
  %v416 = vadd.f32 %v364, %v408
  %v417 = vadd.f32 %v365, %v409
  %v418 = vadd.f32 %v366, %v410
  %v419 = vadd.f32 %v367, %v411
  %v420 = vadd.f32 %v368, %v412
  %v421 = vadd.f32 %v369, %v413
  %v422 = vadd.f32 %v370, %v414
  %423 = vset.pattern.permute.xlu0 7
  %424 = vperm.xlu0 %423, %v28
  %v425 = vpop.permute.xlu0 %424
  %427 = vset.pattern.permute.xlu0 7
  %428 = vperm.xlu0 %427, %v29
  %v429 = vpop.permute.xlu0 %428
  %431 = vset.pattern.permute.xlu0 7
  %432 = vperm.xlu0 %431, %v30
  %v433 = vpop.permute.xlu0 %432
  %435 = vset.pattern.permute.xlu0 7
  %436 = vperm.xlu0 %435, %v31
  %v437 = vpop.permute.xlu0 %436
  %439 = vset.pattern.permute.xlu0 7
  %440 = vperm.xlu0 %439, %v32
  %v441 = vpop.permute.xlu0 %440
  %443 = vset.pattern.permute.xlu0 7
  %444 = vperm.xlu0 %443, %v33
  %v445 = vpop.permute.xlu0 %444
  %447 = vset.pattern.permute.xlu0 7
  %448 = vperm.xlu0 %447, %v34
  %v449 = vpop.permute.xlu0 %448
  %451 = vset.pattern.permute.xlu0 7
  %452 = vperm.xlu0 %451, %v35
  %v453 = vpop.permute.xlu0 %452
  %v455 = vlaneseq
  %v456 = vshrl.u32 %v455, 7
  %v457 = vsub.s32 7, %v456
  %v458 = vrot.slane %v57, %v457
  %v459 = vmul.f32 %v425, %v458
  %v460 = vmul.f32 %v429, %v458
  %v461 = vmul.f32 %v433, %v458
  %v462 = vmul.f32 %v437, %v458
  %v463 = vmul.f32 %v441, %v458
  %v464 = vmul.f32 %v445, %v458
  %v465 = vmul.f32 %v449, %v458
  %v466 = vmul.f32 %v453, %v458
  %v467 = vadd.f32 %v415, %v459
  %v468 = vadd.f32 %v416, %v460
  %v469 = vadd.f32 %v417, %v461
  %v470 = vadd.f32 %v418, %v462
  %v471 = vadd.f32 %v419, %v463
  %v472 = vadd.f32 %v420, %v464
  %v473 = vadd.f32 %v421, %v465
  %v474 = vadd.f32 %v422, %v466
  %475 = vset.pattern.permute.xlu0 8
  %476 = vperm.xlu0 %475, %v28
  %v477 = vpop.permute.xlu0 %476
  %479 = vset.pattern.permute.xlu0 8
  %480 = vperm.xlu0 %479, %v29
  %v481 = vpop.permute.xlu0 %480
  %483 = vset.pattern.permute.xlu0 8
  %484 = vperm.xlu0 %483, %v30
  %v485 = vpop.permute.xlu0 %484
  %487 = vset.pattern.permute.xlu0 8
  %488 = vperm.xlu0 %487, %v31
  %v489 = vpop.permute.xlu0 %488
  %491 = vset.pattern.permute.xlu0 8
  %492 = vperm.xlu0 %491, %v32
  %v493 = vpop.permute.xlu0 %492
  %495 = vset.pattern.permute.xlu0 8
  %496 = vperm.xlu0 %495, %v33
  %v497 = vpop.permute.xlu0 %496
  %499 = vset.pattern.permute.xlu0 8
  %500 = vperm.xlu0 %499, %v34
  %v501 = vpop.permute.xlu0 %500
  %503 = vset.pattern.permute.xlu0 8
  %504 = vperm.xlu0 %503, %v35
  %v505 = vpop.permute.xlu0 %504
  %v507 = vlaneseq
  %v508 = vshrl.u32 %v507, 7
  %v509 = vsub.s32 0, %v508
  %v510 = vrot.slane %v58, %v509
  %v511 = vmul.f32 %v477, %v510
  %v512 = vmul.f32 %v481, %v510
  %v513 = vmul.f32 %v485, %v510
  %v514 = vmul.f32 %v489, %v510
  %v515 = vmul.f32 %v493, %v510
  %v516 = vmul.f32 %v497, %v510
  %v517 = vmul.f32 %v501, %v510
  %v518 = vmul.f32 %v505, %v510
  %v519 = vadd.f32 %v467, %v511
  %v520 = vadd.f32 %v468, %v512
  %v521 = vadd.f32 %v469, %v513
  %v522 = vadd.f32 %v470, %v514
  %v523 = vadd.f32 %v471, %v515
  %v524 = vadd.f32 %v472, %v516
  %v525 = vadd.f32 %v473, %v517
  %v526 = vadd.f32 %v474, %v518
  %528 = vset.pattern.permute.xlu0 0
  %529 = vperm.xlu0 %528, %v36
  %v530 = vpop.permute.xlu0 %529
  %533 = vset.pattern.permute.xlu0 0
  %534 = vperm.xlu0 %533, %v37
  %v535 = vpop.permute.xlu0 %534
  %538 = vset.pattern.permute.xlu0 0
  %539 = vperm.xlu0 %538, %v38
  %v540 = vpop.permute.xlu0 %539
  %543 = vset.pattern.permute.xlu0 0
  %544 = vperm.xlu0 %543, %v39
  %v545 = vpop.permute.xlu0 %544
  %548 = vset.pattern.permute.xlu0 0
  %549 = vperm.xlu0 %548, %v40
  %v550 = vpop.permute.xlu0 %549
  %553 = vset.pattern.permute.xlu0 0
  %554 = vperm.xlu0 %553, %v41
  %v555 = vpop.permute.xlu0 %554
  %558 = vset.pattern.permute.xlu0 0
  %559 = vperm.xlu0 %558, %v42
  %v560 = vpop.permute.xlu0 %559
  %563 = vset.pattern.permute.xlu0 0
  %564 = vperm.xlu0 %563, %v43
  %v565 = vpop.permute.xlu0 %564
  %v567 = vadd.f32 %v519, %v530
  %v568 = vadd.f32 %v520, %v535
  %v569 = vadd.f32 %v521, %v540
  %v570 = vadd.f32 %v522, %v545
  %v571 = vadd.f32 %v523, %v550
  %v572 = vadd.f32 %v524, %v555
  %v573 = vadd.f32 %v525, %v560
  %v574 = vadd.f32 %v526, %v565
  %v575 = vmax.f32 %v567, 0.0
  %v576 = vmax.f32 %v568, 0.0
  %v577 = vmax.f32 %v569, 0.0
  %v578 = vmax.f32 %v570, 0.0
  %v579 = vmax.f32 %v571, 0.0
  %v580 = vmax.f32 %v572, 0.0
  %v581 = vmax.f32 %v573, 0.0
  %v582 = vmax.f32 %v574, 0.0
  %584 = vset.pattern.permute.xlu0 0
  %585 = vperm.xlu0 %584, %v48
  %v586 = vpop.permute.xlu0 %585
  %589 = vset.pattern.permute.xlu0 0
  %590 = vperm.xlu0 %589, %v49
  %v591 = vpop.permute.xlu0 %590
  %594 = vset.pattern.permute.xlu0 0
  %595 = vperm.xlu0 %594, %v50
  %v596 = vpop.permute.xlu0 %595
  %599 = vset.pattern.permute.xlu0 0
  %600 = vperm.xlu0 %599, %v51
  %v601 = vpop.permute.xlu0 %600
  %vm603 = vcmask 523264
  %v605 = vsel %vm603, %v44, 0
  %v608 = vsel %vm603, %v45, 0
  %v611 = vsel %vm603, %v46, 0
  %v614 = vsel %vm603, %v47, 0
  %616 = vmatprep.subr.mxu0 0.0
  %617 = vmatpush1.msra.mxu0 %v575
  %618 = vmatprep.subr.mxu0 0.0
  %619 = vmatpush1.msra.mxu0 %v576
  %620 = vmatprep.subr.mxu0 0.0
  %621 = vmatpush1.msra.mxu0 %v577
  %622 = vmatprep.subr.mxu0 0.0
  %623 = vmatpush1.msra.mxu0 %v578
  %624 = vmatprep.subr.mxu0 0.0
  %625 = vmatpush1.msra.mxu0 %v579
  %626 = vmatprep.subr.mxu0 0.0
  %627 = vmatpush1.msra.mxu0 %v580
  %628 = vmatprep.subr.mxu0 0.0
  %629 = vmatpush1.msra.mxu0 %v581
  %630 = vmatprep.subr.mxu0 0.0
  %631 = vmatpush1.msra.mxu0 %v582
  %632 = vmatprep.subr.mxu0 0.0
  %633 = vmatpush1.msra.mxu0 0.0
  %634 = vmatprep.subr.mxu0 0.0
  %635 = vmatpush1.msra.mxu0 0.0
  %636 = vmatprep.subr.mxu0 0.0
  %637 = vmatpush1.msra.mxu0 0.0
  %638 = vmatprep.subr.mxu0 0.0
  %639 = vmatpush1.msra.mxu0 0.0
  %640 = vmatprep.subr.mxu0 0.0
  %641 = vmatpush1.msra.mxu0 0.0
  %642 = vmatprep.subr.mxu0 0.0
  %643 = vmatpush1.msra.mxu0 0.0
  %644 = vmatprep.subr.mxu0 0.0
  %645 = vmatpush1.msra.mxu0 0.0
  %646 = vmatprep.subr.mxu0 0.0
  %647 = vmatpush1.msra.mxu0 0.0
  %648 = vmatprep.subr.mxu0 0.0
  %649 = vmatpush1.msra.mxu0 0.0
  %650 = vmatprep.subr.mxu0 0.0
  %651 = vmatpush1.msra.mxu0 0.0
  %652 = vmatprep.subr.mxu0 0.0
  %653 = vmatpush1.msra.mxu0 0.0
  %654 = vmatprep.subr.mxu0 0.0
  %655 = vmatpush1.msra.mxu0 0.0
  %656 = vmatprep.subr.mxu0 0.0
  %657 = vmatpush1.msra.mxu0 0.0
  %658 = vmatprep.subr.mxu0 0.0
  %659 = vmatpush1.msra.mxu0 0.0
  %660 = vmatprep.subr.mxu0 0.0
  %661 = vmatpush1.msra.mxu0 0.0
  %662 = vmatprep.subr.mxu0 0.0
  %663 = vmatpush1.msra.mxu0 0.0
  %664 = vmatprep.subr.mxu0 0.0
  %665 = vmatpush1.msra.mxu0 0.0
  %666 = vmatprep.subr.mxu0 0.0
  %667 = vmatpush1.msra.mxu0 0.0
  %668 = vmatprep.subr.mxu0 0.0
  %669 = vmatpush1.msra.mxu0 0.0
  %670 = vmatprep.subr.mxu0 0.0
  %671 = vmatpush1.msra.mxu0 0.0
  %672 = vmatprep.subr.mxu0 0.0
  %673 = vmatpush1.msra.mxu0 0.0
  %674 = vmatprep.subr.mxu0 0.0
  %675 = vmatpush1.msra.mxu0 0.0
  %676 = vmatprep.subr.mxu0 0.0
  %677 = vmatpush1.msra.mxu0 0.0
  %678 = vmatprep.subr.mxu0 0.0
  %679 = vmatpush1.msra.mxu0 0.0
  %680 = vmatprep.mubr.f32.mxu0 0.0
  %681 = vmatmul.mubr.f32.gmra.mrb[0].mxu0 %v605
  %v682 = vpop.f32.mrb[0].mxu0
  %v683 = vadd.f32 %v586, %v682
  %v684 = vpop.f32.mrb[0].mxu0
  %685 = vmatprep.mubr.f32.mxu0 0.0
  %686 = vmatmul.mubr.f32.gmra.mrb[0].mxu0 %v608
  %v687 = vpop.f32.mrb[0].mxu0
  %v688 = vadd.f32 %v591, %v687
  %v689 = vpop.f32.mrb[0].mxu0
  %690 = vmatprep.mubr.f32.mxu0 0.0
  %691 = vmatmul.mubr.f32.gmra.mrb[0].mxu0 %v611
  %v692 = vpop.f32.mrb[0].mxu0
  %v693 = vadd.f32 %v596, %v692
  %v694 = vpop.f32.mrb[0].mxu0
  %695 = vmatprep.mubr.f32.mxu0 0.0
  %696 = vmatmul.mubr.f32.gmra.mrb[0].mxu0 %v614
  %v697 = vpop.f32.mrb[0].mxu0
  %v698 = vadd.f32 %v601, %v697
  %v699 = vpop.f32.mrb[0].mxu0
  %700 = vdwg.mxu0
  %v701 = vmax.f32 %v683, 0.0
  %v702 = vmax.f32 %v688, 0.0
  %v703 = vmax.f32 %v693, 0.0
  %v704 = vmax.f32 %v698, 0.0
  %706 = vset.pattern.permute.xlu0 0
  %707 = vperm.xlu0 %706, %v52
  %v708 = vpop.permute.xlu0 %707
  %711 = vset.pattern.permute.xlu0 0
  %712 = vperm.xlu0 %711, %v53
  %v713 = vpop.permute.xlu0 %712
  %716 = vset.pattern.permute.xlu0 0
  %717 = vperm.xlu0 %716, %v54
  %v718 = vpop.permute.xlu0 %717
  %721 = vset.pattern.permute.xlu0 0
  %722 = vperm.xlu0 %721, %v55
  %v723 = vpop.permute.xlu0 %722
  %v725 = vmul.f32 %v701, %v708
  %v726 = vmul.f32 %v702, %v713
  %v727 = vmul.f32 %v703, %v718
  %v728 = vmul.f32 %v704, %v723
  %v729 = vadd.f32 %v725, %v726
  %v730 = vadd.f32 %v729, %v727
  %v731 = vadd.f32 %v730, %v728
  %v732 = vrot.slane %v731, 4
  %v733 = vadd.f32 %v731, %v732
  %v734 = vrot.slane %v733, 2
  %v735 = vadd.f32 %v733, %v734
  %v736 = vrot.slane %v735, 1
  %v737 = vadd.f32 %v735, %v736
  %739 = vset.pattern.permute.xlu0 0
  %740 = vperm.xlu0 %739, %v56
  %v741 = vpop.permute.xlu0 %740
  %v743 = vlaneseq
  %v744 = vshrl.u32 %v743, 7
  %v745 = vsub.s32 0, %v744
  %v746 = vrot.slane %v741, %v745
  %v747 = vadd.f32 %v737, %v746
  %748 = vst [vmem:[%s7] sm:$0x1] %v747
  // Predicated region
  $region30: #{energy_model_forward.1} parent=0 // pred_check
    _
  $region31: #{energy_model_forward.1} parent=0 // pred_check_branch
    %750 = sbr.rel (0) target = $region33
  $region32: #{energy_model_forward.1} parent=0 // pred_region
    _
  $region33: #{energy_model_forward.1} parent=0 // pred_fallthru
    _
  // Predicated region
  $region34: #{energy_model_forward.1} parent=0 // pred_check
    _
  $region35: #{energy_model_forward.1} parent=0 // pred_check_branch
    %752 = sbr.rel (0) target = $region37
  $region36: #{energy_model_forward.1} parent=0 // pred_region
    _
  $region37: #{energy_model_forward.1} parent=0 // pred_fallthru
    _

</llo_original>
